<compile_context>
chip_gen: v6e
topology: v6e:2x2x1
jax: 0.10.0
libtpu: 0.0.40
codegen_flags: <defaults>
</compile_context>

<pallas_src>
import functools

import jax
import jax.numpy as jnp
from jax.experimental import pallas as pl
from jax.experimental.pallas import tpu as pltpu

LANE = 128            # lane width: channel dims padded to this (lane-dense stores)
FUSED_MAX_N_PAD = 1024  # below this, run the single-call A-resident fused path
DEF_MAX_TM = 1024
DEF_MAX_TK = 2048


def _round_up(x, m):
    return (x + m - 1) // m * m


def _largest_divisor_tile(n_pad, cap):
    """Largest multiple of LANE that divides n_pad and is <= cap (>= LANE)."""
    best = LANE
    t = LANE
    cap = min(cap, n_pad)
    while t <= cap:
        if n_pad % t == 0:
            best = t
        t += LANE
    return best


def _tile_plan(n, max_tm, max_tk):
    n_pad = _round_up(max(n, LANE), LANE)
    # Reduction (k) tile: as large as possible (A_hat stream is HBM-bound).
    tk = _largest_divisor_tile(n_pad, max_tk)
    # Row (m) tile: large, but keep >= 2 row tiles when possible so the
    # "parallel" axis shards across both TensorCores on v7x.
    tm_cap = min(max_tm, n_pad // 2) if n_pad >= 2 * LANE else min(max_tm, n_pad)
    tm = _largest_divisor_tile(n_pad, tm_cap)
    return n_pad, tm, tk


# ---------------------------------------------------------------------------
# Tiled streaming kernel: out = epilogue( A_hat @ XW + b ), reduction-last grid
# ---------------------------------------------------------------------------
def _gcn_agg_kernel(a_ref, xw_ref, b_ref, *rest, apply_relu, fuse_w_next, tile_k):
    if fuse_w_next:
        wn_ref, o_ref, acc_ref = rest
    else:
        o_ref, acc_ref = rest

    k = pl.program_id(1)

    @pl.when(k == 0)
    def _():
        acc_ref[...] = jnp.zeros_like(acc_ref)

    # XW is fully VMEM-resident (index_map returns (0,0) for every grid step);
    # slice the current k-tile in-kernel.
    k_start = pl.multiple_of(k * tile_k, tile_k)
    xw_tile = xw_ref[pl.ds(k_start, tile_k), :]

    # bf16 x bf16 -> f32 on the MXU.
    acc_ref[...] += jnp.dot(a_ref[...], xw_tile,
                            preferred_element_type=jnp.float32)

    @pl.when(k == pl.num_programs(1) - 1)
    def _():
        h = acc_ref[...] + b_ref[...]            # f32 epilogue
        if apply_relu:
            h = jnp.maximum(h, 0.0)
        if fuse_w_next:
            # Fused next-layer feature transform on the MXU.
            h = jnp.dot(h.astype(wn_ref.dtype), wn_ref[...],
                        preferred_element_type=jnp.float32)
        o_ref[...] = h.astype(o_ref.dtype)


def gcn_aggregate(a_pad, xw_pad, bias_pad, *, w_next=None, apply_relu,
                  out_dtype, tile_m, tile_k):
    """out = epilogue(A_hat @ XW + b), tiled over (row tiles, k-reduction)."""
    n_pad = a_pad.shape[0]
    c_pad = xw_pad.shape[1]
    grid = (n_pad // tile_m, n_pad // tile_k)

    in_specs = [
        pl.BlockSpec((tile_m, tile_k), lambda i, k: (i, k)),   # A_hat tile (bf16)
        pl.BlockSpec((n_pad, c_pad), lambda i, k: (0, 0)),     # XW: VMEM-resident
        pl.BlockSpec((1, c_pad), lambda i, k: (0, 0)),         # bias (f32)
    ]
    args = [a_pad, xw_pad, bias_pad.reshape(1, c_pad)]
    if w_next is not None:
        out_c = w_next.shape[1]
        in_specs.append(pl.BlockSpec((c_pad, out_c), lambda i, k: (0, 0)))
        args.append(w_next)
    else:
        out_c = c_pad

    kernel = functools.partial(_gcn_agg_kernel, apply_relu=apply_relu,
                               fuse_w_next=w_next is not None, tile_k=tile_k)

    out_bytes = 2 if out_dtype == jnp.bfloat16 else 4
    vmem_need = (2 * tile_m * tile_k * 2        # double-buffered A tiles (bf16)
                 + 2 * n_pad * c_pad * 2        # resident XW (bf16, conservative x2)
                 + 2 * tile_m * out_c * out_bytes
                 + tile_m * c_pad * 4           # f32 accumulator
                 + 2 * (c_pad + c_pad * out_c) * 4)
    vmem_limit = int(min(48 << 20, max(32 << 20, vmem_need + (8 << 20))))

    return pl.pallas_call(
        kernel,
        out_shape=jax.ShapeDtypeStruct((n_pad, out_c), out_dtype),
        grid_spec=pltpu.PrefetchScalarGridSpec(
            num_scalar_prefetch=0,
            grid=grid,
            in_specs=in_specs,
            out_specs=pl.BlockSpec((tile_m, out_c), lambda i, k: (i, 0)),
            scratch_shapes=[pltpu.VMEM((tile_m, c_pad), jnp.float32)],
        ),
        compiler_params=pltpu.CompilerParams(
            dimension_semantics=("parallel", "arbitrary"),
            vmem_limit_bytes=vmem_limit,
        ),
    )(*args)


# ---------------------------------------------------------------------------
# Small-graph path: one pallas_call, A_hat resident in VMEM across BOTH layers
# ---------------------------------------------------------------------------
def _gcn_fused_kernel(a_ref, xw_ref, b1_ref, w2_ref, b2_ref, o_ref):
    a = a_ref[...]                                               # bf16
    h = jnp.dot(a, xw_ref[...], preferred_element_type=jnp.float32) + b1_ref[...]
    h = jnp.maximum(h, 0.0)
    hw2 = jnp.dot(h.astype(w2_ref.dtype), w2_ref[...],
                  preferred_element_type=jnp.float32)
    o_ref[...] = (jnp.dot(a, hw2.astype(a.dtype),
                          preferred_element_type=jnp.float32)
                  + b2_ref[...]).astype(o_ref.dtype)


def gcn_fused_small(a_pad, xw1_pad, b1_pad, w2_pad, b2_pad, out_dtype):
    n_pad = a_pad.shape[0]
    hid_pad = xw1_pad.shape[1]
    out_pad = w2_pad.shape[1]
    return pl.pallas_call(
        _gcn_fused_kernel,
        out_shape=jax.ShapeDtypeStruct((n_pad, out_pad), out_dtype),
        grid_spec=pltpu.PrefetchScalarGridSpec(
            num_scalar_prefetch=0,
            grid=(1,),
            in_specs=[
                pl.BlockSpec((n_pad, n_pad), lambda i: (0, 0)),
                pl.BlockSpec((n_pad, hid_pad), lambda i: (0, 0)),
                pl.BlockSpec((1, hid_pad), lambda i: (0, 0)),
                pl.BlockSpec((hid_pad, out_pad), lambda i: (0, 0)),
                pl.BlockSpec((1, out_pad), lambda i: (0, 0)),
            ],
            out_specs=pl.BlockSpec((n_pad, out_pad), lambda i: (0, 0)),
        ),
        compiler_params=pltpu.CompilerParams(vmem_limit_bytes=32 << 20),
    )(a_pad, xw1_pad, b1_pad.reshape(1, hid_pad), w2_pad,
      b2_pad.reshape(1, out_pad))


# ---------------------------------------------------------------------------
# Plain-JAX glue
# ---------------------------------------------------------------------------
def build_normalized_adjacency_padded(edge_index, num_nodes, n_pad,
                                      dtype=jnp.bfloat16):
    """Dense GCN-normalized adjacency, built directly at padded size, cast once."""
    src, dst = edge_index[0], edge_index[1]
    adj = jnp.zeros((n_pad, n_pad), jnp.float32)
    # GCNConv aggregates messages src -> dst: row = dst, col = src.
    adj = adj.at[dst, src].add(1.0)
    # add_remaining_self_loops: only add a self loop where one is missing.
    idx = jnp.arange(num_nodes)
    diag = adj[idx, idx]
    adj = adj.at[idx, idx].add(jnp.where(diag > 0.0, 0.0, 1.0))
    deg = adj.sum(axis=1)
    d_inv_sqrt = jnp.where(deg > 0.0, jax.lax.rsqrt(deg), 0.0)
    return (adj * d_inv_sqrt[:, None] * d_inv_sqrt[None, :]).astype(dtype)


def glorot(key, shape):
    fan_in, fan_out = shape
    limit = jnp.sqrt(6.0 / (fan_in + fan_out))
    return jax.random.uniform(key, shape, jnp.float32, -limit, limit)


def gcn_encoder_forward(x, edge_index, params, *, force_tiled=False,
                        max_tile_m=DEF_MAX_TM, max_tile_k=DEF_MAX_TK):
    """Forward of GCNEncoder: conv1(x).relu() -> conv2."""
    n, c_in = x.shape
    hidden = params["w1"].shape[1]
    c_out = params["w2"].shape[1]

    n_pad, tm, tk = _tile_plan(n, max_tile_m, max_tile_k)
    hid_pad = _round_up(hidden, LANE)
    out_pad = _round_up(c_out, LANE)

    # A_hat built at padded size and cast to bf16 once (zero padding is inert:
    # padded rows/cols have zero degree -> zero normalized weight).
    a_pad = build_normalized_adjacency_padded(edge_index, n, n_pad, jnp.bfloat16)

    # Tiny feature transform X @ W1 stays in plain JAX.
    w1_pad = jnp.zeros((c_in, hid_pad), jnp.float32).at[:, :hidden].set(params["w1"])
    b1_pad = jnp.zeros((hid_pad,), jnp.float32).at[:hidden].set(params["b1"])
    x_pad = jnp.zeros((n_pad, c_in), jnp.float32).at[:n].set(x.astype(jnp.float32))
    xw1_pad = (x_pad @ w1_pad).astype(jnp.bfloat16)

    w2_pad = jnp.zeros((hid_pad, out_pad), jnp.bfloat16)
    w2_pad = w2_pad.at[:hidden, :c_out].set(params["w2"].astype(jnp.bfloat16))
    b2_pad = jnp.zeros((out_pad,), jnp.float32).at[:c_out].set(params["b2"])

    if n_pad <= FUSED_MAX_N_PAD and not force_tiled:
        # Whole padded A_hat fits comfortably in VMEM: keep it resident across
        # both layers -> A_hat is read from HBM once instead of twice.
        out = gcn_fused_small(a_pad, xw1_pad, b1_pad, w2_pad, b2_pad, jnp.float32)
        return out[:n, :c_out]

    # Large graphs: two streaming passes over A_hat; conv2's feature transform
    # is fused into pass 1's epilogue so h never round-trips HBM at hidden width.
    hw2 = gcn_aggregate(a_pad, xw1_pad, b1_pad, w_next=w2_pad, apply_relu=True,
                        out_dtype=jnp.bfloat16, tile_m=tm, tile_k=tk)
    out = gcn_aggregate(a_pad, hw2, b2_pad, w_next=None, apply_relu=False,
                        out_dtype=jnp.float32, tile_m=tm, tile_k=tk)
    return out[:n, :c_out]


def reference_forward(x, edge_index, params):
    """Pure-JAX reference mirroring the kernel's bf16 quantization points."""
    n = x.shape[0]
    bf = lambda v: v.astype(jnp.bfloat16).astype(jnp.float32)
    a_q = bf(build_normalized_adjacency_padded(edge_index, n, n, jnp.float32))
    xw1_q = bf(x.astype(jnp.float32) @ params["w1"])
    h = jnp.maximum(a_q @ xw1_q + params["b1"], 0.0)
    hw2_q = bf(bf(h) @ bf(params["w2"]))
    return a_q @ hw2_q + params["b2"]


if __name__ == "__main__":
    in_channels = 8
    out_channels = 4
    hidden = 2 * out_channels

    key = jax.random.PRNGKey(0)
    k_x1, k_e1, k_x2, k_e2, k_w1, k_w2 = jax.random.split(key, 6)

    params = {
        "w1": glorot(k_w1, (in_channels, hidden)),
        "b1": jnp.zeros((hidden,), jnp.float32),
        "w2": glorot(k_w2, (hidden, out_channels)),
        "b2": jnp.zeros((out_channels,), jnp.float32),
    }

    def make_graph(kx, ke, n, extra):
        x = jax.random.normal(kx, (n, in_channels), jnp.float32)
        ring_src = jnp.arange(n)
        ring_dst = (ring_src + 1) % n
        rand_src = jax.random.randint(ke, (extra,), 0, n)
        rand_dst = (rand_src + 3) % n
        src = jnp.concatenate([ring_src, ring_dst, rand_src])
        dst = jnp.concatenate([ring_dst, ring_src, rand_dst])
        return x, jnp.stack([src, dst], axis=0).astype(jnp.int32)

    # --- Path 1: spec-shaped small graph -> single fused pallas_call
    #     (A_hat resident in VMEM across both layers). ---
    x1, e1 = make_graph(k_x1, k_e1, 16, 8)
    out1 = jax.jit(gcn_encoder_forward)(x1, e1, params)
    jax.block_until_ready(out1)
    ref1 = reference_forward(x1, e1, params)
    assert out1.shape == (16, out_channels)
    assert jnp.allclose(out1, ref1, atol=1e-2, rtol=1e-2), "fused path mismatch"

    # --- Path 2: force the tiled streaming path with small tiles so the
    #     reduction-last grid, pl.when accumulator init/epilogue, and
    #     resident-XW in-kernel slicing are all exercised (grid = (3, 3)). ---
    x2, e2 = make_graph(k_x2, k_e2, 300, 64)
    fwd_tiled = jax.jit(functools.partial(
        gcn_encoder_forward, force_tiled=True, max_tile_m=128, max_tile_k=128))
    out2 = fwd_tiled(x2, e2, params)
    jax.block_until_ready(out2)
    ref2 = reference_forward(x2, e2, params)
    assert out2.shape == (300, out_channels)
    assert jnp.allclose(out2, ref2, atol=1e-2, rtol=1e-2), "tiled path mismatch"

    print("KERNEL_OK")
</pallas_src>

<mosaic_0001>
module attributes {stable_mosaic.version = 11 : i64} {
  func.func private @main(%arg0: i32) attributes {dimension_semantics = [#tpu.dimension_semantics<core_parallel>], iteration_bounds = array<i64: 2>, tpu.core_type = #tpu.core_type<sc_scalar_subcore>, window_params = []} {
    return
  }
}

module attributes {stable_mosaic.version = 11 : i64} {
  func.func private @main(%arg0: i32) attributes {dimension_semantics = [#tpu.dimension_semantics<core_parallel>], iteration_bounds = array<i64: 2>, tpu.core_type = #tpu.core_type<sc_scalar_subcore>, window_params = []} {
    return
  }
}

module attributes {stable_mosaic.version = 11 : i64} {
  func.func @_gcn_fused_kernel(%arg0: i32, %arg1: memref<128x128xbf16, #tpu.memory_space<vmem>>, %arg2: memref<128x128xbf16, #tpu.memory_space<vmem>>, %arg3: memref<1x128xf32, #tpu.memory_space<vmem>>, %arg4: memref<128x128xbf16, #tpu.memory_space<vmem>>, %arg5: memref<1x128xf32, #tpu.memory_space<vmem>>, %arg6: memref<128x128xf32, #tpu.memory_space<vmem>>) attributes {dimension_semantics = [#tpu.dimension_semantics<arbitrary>], iteration_bounds = array<i64: 1>, scalar_prefetch = 0 : i64, scratch_operands = 0 : i64, tpu.core_type = #tpu.core_type<tc>, window_params = [{pipeline_mode = #tpu.pipeline_mode<synchronous>, transform_indices = @transform_0, window_bounds = array<i64: 128, 128>}, {pipeline_mode = #tpu.pipeline_mode<synchronous>, transform_indices = @transform_1, window_bounds = array<i64: 128, 128>}, {pipeline_mode = #tpu.pipeline_mode<synchronous>, transform_indices = @transform_2, window_bounds = array<i64: 1, 128>}, {pipeline_mode = #tpu.pipeline_mode<synchronous>, transform_indices = @transform_3, window_bounds = array<i64: 128, 128>}, {pipeline_mode = #tpu.pipeline_mode<synchronous>, transform_indices = @transform_4, window_bounds = array<i64: 1, 128>}, {pipeline_mode = #tpu.pipeline_mode<synchronous>, transform_indices = @transform_5, window_bounds = array<i64: 128, 128>}]} {
    %c0 = arith.constant 0 : index
    %c0_0 = arith.constant 0 : index
    %0 = vector.load %arg1[%c0, %c0_0] : memref<128x128xbf16, #tpu.memory_space<vmem>>, vector<128x128xbf16>
    %c0_1 = arith.constant 0 : index
    %c0_2 = arith.constant 0 : index
    %1 = vector.load %arg2[%c0_1, %c0_2] : memref<128x128xbf16, #tpu.memory_space<vmem>>, vector<128x128xbf16>
    %cst = arith.constant dense<0.000000e+00> : vector<128x128xf32>
    %2 = tpu.matmul %0, %1, %cst {dimension_numbers = #tpu.dot_dimension_numbers<[1], [0], [0], [1], [0, 0, 1, 1], [], []>} : vector<128x128xbf16>, vector<128x128xbf16>, vector<128x128xf32> -> vector<128x128xf32>
    %c0_3 = arith.constant 0 : index
    %c0_4 = arith.constant 0 : index
    %3 = vector.load %arg3[%c0_3, %c0_4] : memref<1x128xf32, #tpu.memory_space<vmem>>, vector<1x128xf32>
    %4 = vector.broadcast %3 : vector<1x128xf32> to vector<128x128xf32>
    %5 = arith.addf %2, %4 : vector<128x128xf32>
    %cst_5 = arith.constant 0.000000e+00 : f32
    %6 = vector.broadcast %cst_5 : f32 to vector<128x128xf32>
    %7 = arith.maximumf %5, %6 : vector<128x128xf32>
    %8 = arith.truncf %7 : vector<128x128xf32> to vector<128x128xbf16>
    %c0_6 = arith.constant 0 : index
    %c0_7 = arith.constant 0 : index
    %9 = vector.load %arg4[%c0_6, %c0_7] : memref<128x128xbf16, #tpu.memory_space<vmem>>, vector<128x128xbf16>
    %cst_8 = arith.constant dense<0.000000e+00> : vector<128x128xf32>
    %10 = tpu.matmul %8, %9, %cst_8 {dimension_numbers = #tpu.dot_dimension_numbers<[1], [0], [0], [1], [0, 0, 1, 1], [], []>} : vector<128x128xbf16>, vector<128x128xbf16>, vector<128x128xf32> -> vector<128x128xf32>
    %11 = arith.truncf %10 : vector<128x128xf32> to vector<128x128xbf16>
    %cst_9 = arith.constant dense<0.000000e+00> : vector<128x128xf32>
    %12 = tpu.matmul %0, %11, %cst_9 {dimension_numbers = #tpu.dot_dimension_numbers<[1], [0], [0], [1], [0, 0, 1, 1], [], []>} : vector<128x128xbf16>, vector<128x128xbf16>, vector<128x128xf32> -> vector<128x128xf32>
    %c0_10 = arith.constant 0 : index
    %c0_11 = arith.constant 0 : index
    %13 = vector.load %arg5[%c0_10, %c0_11] : memref<1x128xf32, #tpu.memory_space<vmem>>, vector<1x128xf32>
    %14 = vector.broadcast %13 : vector<1x128xf32> to vector<128x128xf32>
    %15 = arith.addf %12, %14 : vector<128x128xf32>
    %c0_12 = arith.constant 0 : index
    %c0_13 = arith.constant 0 : index
    %16 = vector.load %arg6[%c0_12, %c0_13] : memref<128x128xf32, #tpu.memory_space<vmem>>, vector<128x128xf32>
    tpu.vector_store %arg6[%c0_12, %c0_13], %15 {strides = array<i32>} : memref<128x128xf32, #tpu.memory_space<vmem>>, vector<128x128xf32>,
    return
  }
  func.func @transform_0(%arg0: i32) -> (i32, i32) {
    %c0_i32 = arith.constant 0 : i32
    %c0_i32_0 = arith.constant 0 : i32
    %c0_i32_1 = arith.constant 0 : i32
    return %c0_i32, %c0_i32_0 : i32, i32
  }
  func.func @transform_1(%arg0: i32) -> (i32, i32) {
    %c0_i32 = arith.constant 0 : i32
    %c0_i32_0 = arith.constant 0 : i32
    %c0_i32_1 = arith.constant 0 : i32
    return %c0_i32, %c0_i32_0 : i32, i32
  }
  func.func @transform_2(%arg0: i32) -> (i32, i32) {
    %c0_i32 = arith.constant 0 : i32
    %c0_i32_0 = arith.constant 0 : i32
    %c0_i32_1 = arith.constant 0 : i32
    return %c0_i32, %c0_i32_0 : i32, i32
  }
  func.func @transform_3(%arg0: i32) -> (i32, i32) {
    %c0_i32 = arith.constant 0 : i32
    %c0_i32_0 = arith.constant 0 : i32
    %c0_i32_1 = arith.constant 0 : i32
    return %c0_i32, %c0_i32_0 : i32, i32
  }
  func.func @transform_4(%arg0: i32) -> (i32, i32) {
    %c0_i32 = arith.constant 0 : i32
    %c0_i32_0 = arith.constant 0 : i32
    %c0_i32_1 = arith.constant 0 : i32
    return %c0_i32, %c0_i32_0 : i32, i32
  }
  func.func @transform_5(%arg0: i32) -> (i32, i32) {
    %c0_i32 = arith.constant 0 : i32
    %c0_i32_0 = arith.constant 0 : i32
    %c0_i32_1 = arith.constant 0 : i32
    return %c0_i32, %c0_i32_0 : i32, i32
  }
}

</mosaic_0001>

<llo_original>
// kernel: gcn_encoder_forward.1
$region0: #{gcn_encoder_forward.1}
  #allocation0 [shape = 'u32[]', space=smem, size = 0x4, offset = 0x4, fixed_abs, tag = 'smem constant byte address 0x4 - core index']
  #allocation1 [shape = 'u32[144,128]{1,0:T(1,128)}', space=vmem, size = 0x12000, scoped, tag = 'internal scratch']
  %s0 = inlined_call_operand.vmem [shape: bf16[128,128], index: 0, kind: input, shape index: {}]
  %s1 = inlined_call_operand.vmem [shape: bf16[128,128], index: 1, kind: input, shape index: {}]
  %s2 = inlined_call_operand.vmem [shape: f32[1,128], index: 2, kind: input, shape index: {}]
  %s3 = inlined_call_operand.vmem [shape: bf16[128,128], index: 3, kind: input, shape index: {}]
  %s4 = inlined_call_operand.vmem [shape: f32[1,128], index: 4, kind: input, shape index: {}]
  %s5 = inlined_call_operand.vmem [shape: f32[128,128], index: 5, kind: output, shape index: {}]
  %s6 = sld [smem:[#allocation0]]
  $region30: #{gcn_encoder_forward.1} parent=0
    _
  %s8 = ssub.s32 1, %s6
  %s9 = scalar_select 0, %s8, %s6
  // Predicated region
  $region2: #{gcn_encoder_forward.1} parent=0 // pred_check
    _
  $region3: #{gcn_encoder_forward.1} parent=0 // pred_check_branch
    %11 = sbr.rel (0) target = $region5
  $region4: #{gcn_encoder_forward.1} parent=0 // pred_region
    _
  $region5: #{gcn_encoder_forward.1} parent=0 // pred_fallthru
    _
  // Predicated region
  $region6: #{gcn_encoder_forward.1} parent=0 // pred_check
    _
  $region7: #{gcn_encoder_forward.1} parent=0 // pred_check_branch
    %13 = sbr.rel (0) target = $region9
  $region8: #{gcn_encoder_forward.1} parent=0 // pred_region
    _
  $region9: #{gcn_encoder_forward.1} parent=0 // pred_fallthru
    _
  // Predicated region
  $region10: #{gcn_encoder_forward.1} parent=0 // pred_check
    _
  $region11: #{gcn_encoder_forward.1} parent=0 // pred_check_branch
    %15 = sbr.rel (0) target = $region13
  $region12: #{gcn_encoder_forward.1} parent=0 // pred_region
    _
  $region13: #{gcn_encoder_forward.1} parent=0 // pred_fallthru
    _
  // Predicated region
  $region14: #{gcn_encoder_forward.1} parent=0 // pred_check
    _
  $region15: #{gcn_encoder_forward.1} parent=0 // pred_check_branch
    %17 = sbr.rel (0) target = $region17
  $region16: #{gcn_encoder_forward.1} parent=0 // pred_region
    _
  $region17: #{gcn_encoder_forward.1} parent=0 // pred_fallthru
    _
  // Predicated region
  $region18: #{gcn_encoder_forward.1} parent=0 // pred_check
    _
  $region19: #{gcn_encoder_forward.1} parent=0 // pred_check_branch
    %19 = sbr.rel (0) target = $region21
  $region20: #{gcn_encoder_forward.1} parent=0 // pred_region
    _
  $region21: #{gcn_encoder_forward.1} parent=0 // pred_fallthru
    _
  %v21 = vld [vmem:[%s0] sm:$0xf]
  %v22 = vld [vmem:[%s0 + $0x4] sm:$0xf]
  %v23 = vld [vmem:[%s0 + $0x8] sm:$0xf]
  %v24 = vld [vmem:[%s0 + $0xc] sm:$0xf]
  %v25 = vld [vmem:[%s0 + $0x10] sm:$0xf]
  %v26 = vld [vmem:[%s0 + $0x14] sm:$0xf]
  %v27 = vld [vmem:[%s0 + $0x18] sm:$0xf]
  %v28 = vld [vmem:[%s0 + $0x1c] sm:$0xf]
  %v29 = vld [vmem:[%s0 + $0x20] sm:$0xf]
  %v30 = vld [vmem:[%s0 + $0x24] sm:$0xf]
  %v31 = vld [vmem:[%s0 + $0x28] sm:$0xf]
  %v32 = vld [vmem:[%s0 + $0x2c] sm:$0xf]
  %v33 = vld [vmem:[%s0 + $0x30] sm:$0xf]
  %v34 = vld [vmem:[%s0 + $0x34] sm:$0xf]
  %v35 = vld [vmem:[%s0 + $0x38] sm:$0xf]
  %v36 = vld [vmem:[%s0 + $0x3c] sm:$0xf]
  %v37 = vld [vmem:[%s1] sm:$0xf]
  %v38 = vld [vmem:[%s1 + $0x4] sm:$0xf]
  %v39 = vld [vmem:[%s1 + $0x8] sm:$0xf]
  %v40 = vld [vmem:[%s1 + $0xc] sm:$0xf]
  %v41 = vld [vmem:[%s1 + $0x10] sm:$0xf]
  %v42 = vld [vmem:[%s1 + $0x14] sm:$0xf]
  %v43 = vld [vmem:[%s1 + $0x18] sm:$0xf]
  %v44 = vld [vmem:[%s1 + $0x1c] sm:$0xf]
  %v45 = vld [vmem:[%s1 + $0x20] sm:$0xf]
  %v46 = vld [vmem:[%s1 + $0x24] sm:$0xf]
  %v47 = vld [vmem:[%s1 + $0x28] sm:$0xf]
  %v48 = vld [vmem:[%s1 + $0x2c] sm:$0xf]
  %v49 = vld [vmem:[%s1 + $0x30] sm:$0xf]
  %v50 = vld [vmem:[%s1 + $0x34] sm:$0xf]
  %v51 = vld [vmem:[%s1 + $0x38] sm:$0xf]
  %v52 = vld [vmem:[%s1 + $0x3c] sm:$0xf]
  %v53 = vld [vmem:[%s2] sm:$0x1]
  %v55 = vlaneseq
  %v56 = vshrl.u32 %v55, 7
  %v57 = vsub.s32 0, %v56
  %v58 = vrot.slane %v53, %v57
  %v76 = vunpack.c.l.b16 %v21
  %v77 = vunpack.c.l.b16 %v22
  %v78 = vunpack.c.l.b16 %v23
  %v79 = vunpack.c.l.b16 %v24
  %v80 = vunpack.c.l.b16 %v25
  %v81 = vunpack.c.l.b16 %v26
  %v82 = vunpack.c.l.b16 %v27
  %v83 = vunpack.c.l.b16 %v28
  %v84 = vunpack.c.l.b16 %v29
  %v85 = vunpack.c.l.b16 %v30
  %v86 = vunpack.c.l.b16 %v31
  %v87 = vunpack.c.l.b16 %v32
  %v88 = vunpack.c.l.b16 %v33
  %v89 = vunpack.c.l.b16 %v34
  %v90 = vunpack.c.l.b16 %v35
  %v91 = vunpack.c.l.b16 %v36
  %v92 = vpack.c.b16 %v77, %v76
  %v93 = vpack.c.b16 %v79, %v78
  %v94 = vpack.c.b16 %v81, %v80
  %v95 = vpack.c.b16 %v83, %v82
  %v96 = vpack.c.b16 %v85, %v84
  %v97 = vpack.c.b16 %v87, %v86
  %v98 = vpack.c.b16 %v89, %v88
  %v99 = vpack.c.b16 %v91, %v90
  %v124 = vunpack.c.l.b16 %v37
  %v125 = vunpack.c.l.b16 %v38
  %v126 = vunpack.c.l.b16 %v39
  %v127 = vunpack.c.l.b16 %v40
  %v128 = vunpack.c.l.b16 %v41
  %v129 = vunpack.c.l.b16 %v42
  %v130 = vunpack.c.l.b16 %v43
  %v131 = vunpack.c.l.b16 %v44
  %v132 = vunpack.c.l.b16 %v45
  %v133 = vunpack.c.l.b16 %v46
  %v134 = vunpack.c.l.b16 %v47
  %v135 = vunpack.c.l.b16 %v48
  %v136 = vunpack.c.l.b16 %v49
  %v137 = vunpack.c.l.b16 %v50
  %v138 = vunpack.c.l.b16 %v51
  %v139 = vunpack.c.l.b16 %v52
  %v140 = vpack.c.b16 %v125, %v124
  %v141 = vpack.c.b16 %v127, %v126
  %v142 = vpack.c.b16 %v129, %v128
  %v143 = vpack.c.b16 %v131, %v130
  %v144 = vpack.c.b16 %v133, %v132
  %v145 = vpack.c.b16 %v135, %v134
  %v146 = vpack.c.b16 %v137, %v136
  %v147 = vpack.c.b16 %v139, %v138
  %156 = vmatprep.subr.bf16.mxu0 0
  %157 = vmatpush1.bf16.msra.mxu0 %v147
  %158 = vmatprep.subr.bf16.mxu0 0
  %159 = vmatpush1.bf16.msra.mxu0 %v146
  %160 = vmatprep.subr.bf16.mxu0 0
  %161 = vmatpush1.bf16.msra.mxu0 %v145
  %162 = vmatprep.subr.bf16.mxu0 0
  %163 = vmatpush1.bf16.msra.mxu0 %v144
  %164 = vmatprep.subr.bf16.mxu0 0
  %165 = vmatpush1.bf16.msra.mxu0 %v143
  %166 = vmatprep.subr.bf16.mxu0 0
  %167 = vmatpush1.bf16.msra.mxu0 %v142
  %168 = vmatprep.subr.bf16.mxu0 0
  %169 = vmatpush1.bf16.msra.mxu0 %v141
  %170 = vmatprep.subr.bf16.mxu0 0
  %171 = vmatpush1.bf16.msra.mxu0 %v140
  %172 = vmatprep.subr.bf16.mxu0 0
  %173 = vmatpush2.bf16.msra.mxu0 0
  %174 = vmatprep.subr.bf16.mxu0 0
  %175 = vmatpush2.bf16.msra.mxu0 0
  %176 = vmatprep.subr.bf16.mxu0 0
  %177 = vmatpush2.bf16.msra.mxu0 0
  %178 = vmatprep.subr.bf16.mxu0 0
  %179 = vmatpush2.bf16.msra.mxu0 0
  %180 = vmatprep.subr.bf16.mxu0 0
  %181 = vmatpush2.bf16.msra.mxu0 0
  %182 = vmatprep.subr.bf16.mxu0 0
  %183 = vmatpush2.bf16.msra.mxu0 0
  %184 = vmatprep.subr.bf16.mxu0 0
  %185 = vmatpush2.bf16.msra.mxu0 0
  %186 = vmatprep.subr.bf16.mxu0 0
  %187 = vmatpush2.bf16.msra.mxu0 0
  %188 = vmatprep.mubr.bf16.mxu0 0
  %189 = vmatmul.mubr.bf16.gmra.mxu0 %v92
  %v190 = vpop.f32.mrf.mxu0
  %v191 = vadd.f32 %v58, %v190
  %v192 = vpop.f32.mrf.mxu0
  %v193 = vpop.f32.mrf.mxu0
  %v194 = vadd.f32 %v58, %v193
  %v195 = vpop.f32.mrf.mxu0
  %196 = vmatprep.mubr.bf16.mxu0 0
  %197 = vmatmul.mubr.bf16.gmra.mxu0 %v93
  %v198 = vpop.f32.mrf.mxu0
  %v199 = vadd.f32 %v58, %v198
  %v200 = vpop.f32.mrf.mxu0
  %v201 = vpop.f32.mrf.mxu0
  %v202 = vadd.f32 %v58, %v201
  %v203 = vpop.f32.mrf.mxu0
  %204 = vmatprep.mubr.bf16.mxu0 0
  %205 = vmatmul.mubr.bf16.gmra.mxu0 %v94
  %v206 = vpop.f32.mrf.mxu0
  %v207 = vadd.f32 %v58, %v206
  %v208 = vpop.f32.mrf.mxu0
  %v209 = vpop.f32.mrf.mxu0
  %v210 = vadd.f32 %v58, %v209
  %v211 = vpop.f32.mrf.mxu0
  %212 = vmatprep.mubr.bf16.mxu0 0
  %213 = vmatmul.mubr.bf16.gmra.mxu0 %v95
  %v214 = vpop.f32.mrf.mxu0
  %v215 = vadd.f32 %v58, %v214
  %v216 = vpop.f32.mrf.mxu0
  %v217 = vpop.f32.mrf.mxu0
  %v218 = vadd.f32 %v58, %v217
  %v219 = vpop.f32.mrf.mxu0
  %220 = vmatprep.mubr.bf16.mxu0 0
  %221 = vmatmul.mubr.bf16.gmra.mxu0 %v96
  %v222 = vpop.f32.mrf.mxu0
  %v223 = vadd.f32 %v58, %v222
  %v224 = vpop.f32.mrf.mxu0
  %v225 = vpop.f32.mrf.mxu0
  %v226 = vadd.f32 %v58, %v225
  %v227 = vpop.f32.mrf.mxu0
  %228 = vmatprep.mubr.bf16.mxu0 0
  %229 = vmatmul.mubr.bf16.gmra.mxu0 %v97
  %v230 = vpop.f32.mrf.mxu0
  %v231 = vadd.f32 %v58, %v230
  %v232 = vpop.f32.mrf.mxu0
  %v233 = vpop.f32.mrf.mxu0
  %v234 = vadd.f32 %v58, %v233
  %v235 = vpop.f32.mrf.mxu0
  %236 = vmatprep.mubr.bf16.mxu0 0
  %237 = vmatmul.mubr.bf16.gmra.mxu0 %v98
  %v238 = vpop.f32.mrf.mxu0
  %v239 = vadd.f32 %v58, %v238
  %v240 = vpop.f32.mrf.mxu0
  %v241 = vpop.f32.mrf.mxu0
  %v242 = vadd.f32 %v58, %v241
  %v243 = vpop.f32.mrf.mxu0
  %244 = vmatprep.mubr.bf16.mxu0 0
  %245 = vmatmul.mubr.bf16.gmra.mxu0 %v99
  %v246 = vpop.f32.mrf.mxu0
  %v247 = vadd.f32 %v58, %v246
  %v248 = vpop.f32.mrf.mxu0
  %v249 = vpop.f32.mrf.mxu0
  %v250 = vadd.f32 %v58, %v249
  %v251 = vpop.f32.mrf.mxu0
  %252 = vdwg.mxu0
  %v253 = vmax.f32 %v191, 0.0
  %v254 = vmax.f32 %v194, 0.0
  %v255 = vmax.f32 %v199, 0.0
  %v256 = vmax.f32 %v202, 0.0
  %v257 = vmax.f32 %v207, 0.0
  %v258 = vmax.f32 %v210, 0.0
  %v259 = vmax.f32 %v215, 0.0
  %v260 = vmax.f32 %v218, 0.0
  %v261 = vmax.f32 %v223, 0.0
  %v262 = vmax.f32 %v226, 0.0
  %v263 = vmax.f32 %v231, 0.0
  %v264 = vmax.f32 %v234, 0.0
  %v265 = vmax.f32 %v239, 0.0
  %v266 = vmax.f32 %v242, 0.0
  %v267 = vmax.f32 %v247, 0.0
  %v268 = vmax.f32 %v250, 0.0
  %v269 = vpack.c.bf16 %v254, %v253
  %v270 = vpack.c.bf16 %v256, %v255
  %v271 = vpack.c.bf16 %v258, %v257
  %v272 = vpack.c.bf16 %v260, %v259
  %v273 = vpack.c.bf16 %v262, %v261
  %v274 = vpack.c.bf16 %v264, %v263
  %v275 = vpack.c.bf16 %v266, %v265
  %v276 = vpack.c.bf16 %v268, %v267
  %v277 = vld [vmem:[%s3] sm:$0xf]
  %v278 = vld [vmem:[%s3 + $0x4] sm:$0xf]
  %v279 = vld [vmem:[%s3 + $0x8] sm:$0xf]
  %v280 = vld [vmem:[%s3 + $0xc] sm:$0xf]
  %v281 = vld [vmem:[%s3 + $0x10] sm:$0xf]
  %v282 = vld [vmem:[%s3 + $0x14] sm:$0xf]
  %v283 = vld [vmem:[%s3 + $0x18] sm:$0xf]
  %v284 = vld [vmem:[%s3 + $0x1c] sm:$0xf]
  %v285 = vld [vmem:[%s3 + $0x20] sm:$0xf]
  %v286 = vld [vmem:[%s3 + $0x24] sm:$0xf]
  %v287 = vld [vmem:[%s3 + $0x28] sm:$0xf]
  %v288 = vld [vmem:[%s3 + $0x2c] sm:$0xf]
  %v289 = vld [vmem:[%s3 + $0x30] sm:$0xf]
  %v290 = vld [vmem:[%s3 + $0x34] sm:$0xf]
  %v291 = vld [vmem:[%s3 + $0x38] sm:$0xf]
  %v292 = vld [vmem:[%s3 + $0x3c] sm:$0xf]
  %v309 = vunpack.c.l.b16 %v277
  %v310 = vunpack.c.l.b16 %v278
  %v311 = vunpack.c.l.b16 %v279
  %v312 = vunpack.c.l.b16 %v280
  %v313 = vunpack.c.l.b16 %v281
  %v314 = vunpack.c.l.b16 %v282
  %v315 = vunpack.c.l.b16 %v283
  %v316 = vunpack.c.l.b16 %v284
  %v317 = vunpack.c.l.b16 %v285
  %v318 = vunpack.c.l.b16 %v286
  %v319 = vunpack.c.l.b16 %v287
  %v320 = vunpack.c.l.b16 %v288
  %v321 = vunpack.c.l.b16 %v289
  %v322 = vunpack.c.l.b16 %v290
  %v323 = vunpack.c.l.b16 %v291
  %v324 = vunpack.c.l.b16 %v292
  %v325 = vpack.c.b16 %v310, %v309
  %v326 = vpack.c.b16 %v312, %v311
  %v327 = vpack.c.b16 %v314, %v313
  %v328 = vpack.c.b16 %v316, %v315
  %v329 = vpack.c.b16 %v318, %v317
  %v330 = vpack.c.b16 %v320, %v319
  %v331 = vpack.c.b16 %v322, %v321
  %v332 = vpack.c.b16 %v324, %v323
  %341 = vmatprep.subr.bf16.mxu0 0
  %342 = vmatpush1.bf16.msra.mxu0 %v332
  %343 = vmatprep.subr.bf16.mxu0 0
  %344 = vmatpush1.bf16.msra.mxu0 %v331
  %345 = vmatprep.subr.bf16.mxu0 0
  %346 = vmatpush1.bf16.msra.mxu0 %v330
  %347 = vmatprep.subr.bf16.mxu0 0
  %348 = vmatpush1.bf16.msra.mxu0 %v329
  %349 = vmatprep.subr.bf16.mxu0 0
  %350 = vmatpush1.bf16.msra.mxu0 %v328
  %351 = vmatprep.subr.bf16.mxu0 0
  %352 = vmatpush1.bf16.msra.mxu0 %v327
  %353 = vmatprep.subr.bf16.mxu0 0
  %354 = vmatpush1.bf16.msra.mxu0 %v326
  %355 = vmatprep.subr.bf16.mxu0 0
  %356 = vmatpush1.bf16.msra.mxu0 %v325
  %357 = vmatprep.subr.bf16.mxu0 0
  %358 = vmatpush2.bf16.msra.mxu0 0
  %359 = vmatprep.subr.bf16.mxu0 0
  %360 = vmatpush2.bf16.msra.mxu0 0
  %361 = vmatprep.subr.bf16.mxu0 0
  %362 = vmatpush2.bf16.msra.mxu0 0
  %363 = vmatprep.subr.bf16.mxu0 0
  %364 = vmatpush2.bf16.msra.mxu0 0
  %365 = vmatprep.subr.bf16.mxu0 0
  %366 = vmatpush2.bf16.msra.mxu0 0
  %367 = vmatprep.subr.bf16.mxu0 0
  %368 = vmatpush2.bf16.msra.mxu0 0
  %369 = vmatprep.subr.bf16.mxu0 0
  %370 = vmatpush2.bf16.msra.mxu0 0
  %371 = vmatprep.subr.bf16.mxu0 0
  %372 = vmatpush2.bf16.msra.mxu0 0
  %373 = vmatprep.mubr.bf16.mxu0 0
  %374 = vmatmul.mubr.bf16.gmra.mxu0 %v269
  %v375 = vpop.f32.mrf.mxu0
  %v376 = vadd.f32 0.0, %v375
  %v377 = vpop.f32.mrf.mxu0
  %v378 = vpop.f32.mrf.mxu0
  %v379 = vadd.f32 0.0, %v378
  %v380 = vpop.f32.mrf.mxu0
  %381 = vmatprep.mubr.bf16.mxu0 0
  %382 = vmatmul.mubr.bf16.gmra.mxu0 %v270
  %v383 = vpop.f32.mrf.mxu0
  %v384 = vadd.f32 0.0, %v383
  %v385 = vpop.f32.mrf.mxu0
  %v386 = vpop.f32.mrf.mxu0
  %v387 = vadd.f32 0.0, %v386
  %v388 = vpop.f32.mrf.mxu0
  %389 = vmatprep.mubr.bf16.mxu0 0
  %390 = vmatmul.mubr.bf16.gmra.mxu0 %v271
  %v391 = vpop.f32.mrf.mxu0
  %v392 = vadd.f32 0.0, %v391
  %v393 = vpop.f32.mrf.mxu0
  %v394 = vpop.f32.mrf.mxu0
  %v395 = vadd.f32 0.0, %v394
  %v396 = vpop.f32.mrf.mxu0
  %397 = vmatprep.mubr.bf16.mxu0 0
  %398 = vmatmul.mubr.bf16.gmra.mxu0 %v272
  %v399 = vpop.f32.mrf.mxu0
  %v400 = vadd.f32 0.0, %v399
  %v401 = vpop.f32.mrf.mxu0
  %v402 = vpop.f32.mrf.mxu0
  %v403 = vadd.f32 0.0, %v402
  %v404 = vpop.f32.mrf.mxu0
  %405 = vmatprep.mubr.bf16.mxu0 0
  %406 = vmatmul.mubr.bf16.gmra.mxu0 %v273
  %v407 = vpop.f32.mrf.mxu0
  %v408 = vadd.f32 0.0, %v407
  %v409 = vpop.f32.mrf.mxu0
  %v410 = vpop.f32.mrf.mxu0
  %v411 = vadd.f32 0.0, %v410
  %v412 = vpop.f32.mrf.mxu0
  %413 = vmatprep.mubr.bf16.mxu0 0
  %414 = vmatmul.mubr.bf16.gmra.mxu0 %v274
  %v415 = vpop.f32.mrf.mxu0
  %v416 = vadd.f32 0.0, %v415
  %v417 = vpop.f32.mrf.mxu0
  %v418 = vpop.f32.mrf.mxu0
  %v419 = vadd.f32 0.0, %v418
  %v420 = vpop.f32.mrf.mxu0
  %421 = vmatprep.mubr.bf16.mxu0 0
  %422 = vmatmul.mubr.bf16.gmra.mxu0 %v275
  %v423 = vpop.f32.mrf.mxu0
  %v424 = vadd.f32 0.0, %v423
  %v425 = vpop.f32.mrf.mxu0
  %v426 = vpop.f32.mrf.mxu0
  %v427 = vadd.f32 0.0, %v426
  %v428 = vpop.f32.mrf.mxu0
  %429 = vmatprep.mubr.bf16.mxu0 0
  %430 = vmatmul.mubr.bf16.gmra.mxu0 %v276
  %v431 = vpop.f32.mrf.mxu0
  %v432 = vadd.f32 0.0, %v431
  %v433 = vpop.f32.mrf.mxu0
  %v434 = vpop.f32.mrf.mxu0
  %v435 = vadd.f32 0.0, %v434
  %v436 = vpop.f32.mrf.mxu0
  %437 = vdwg.mxu0
  %v438 = vpack.c.bf16 %v379, %v376
  %v439 = vpack.c.bf16 %v387, %v384
  %v440 = vpack.c.bf16 %v395, %v392
  %v441 = vpack.c.bf16 %v403, %v400
  %v442 = vpack.c.bf16 %v411, %v408
  %v443 = vpack.c.bf16 %v419, %v416
  %v444 = vpack.c.bf16 %v427, %v424
  %v445 = vpack.c.bf16 %v435, %v432
  %v446 = vld [vmem:[%s4] sm:$0x1]
  %v448 = vlaneseq
  %v449 = vshrl.u32 %v448, 7
  %v450 = vsub.s32 0, %v449
  %v451 = vrot.slane %v446, %v450
  %453 = vmatprep.subr.bf16.mxu0 0
  %454 = vmatpush1.bf16.msra.mxu0 %v445
  %455 = vmatprep.subr.bf16.mxu0 0
  %456 = vmatpush1.bf16.msra.mxu0 %v444
  %457 = vmatprep.subr.bf16.mxu0 0
  %458 = vmatpush1.bf16.msra.mxu0 %v443
  %459 = vmatprep.subr.bf16.mxu0 0
  %460 = vmatpush1.bf16.msra.mxu0 %v442
  %461 = vmatprep.subr.bf16.mxu0 0
  %462 = vmatpush1.bf16.msra.mxu0 %v441
  %463 = vmatprep.subr.bf16.mxu0 0
  %464 = vmatpush1.bf16.msra.mxu0 %v440
  %465 = vmatprep.subr.bf16.mxu0 0
  %466 = vmatpush1.bf16.msra.mxu0 %v439
  %467 = vmatprep.subr.bf16.mxu0 0
  %468 = vmatpush1.bf16.msra.mxu0 %v438
  %469 = vmatprep.subr.bf16.mxu0 0
  %470 = vmatpush2.bf16.msra.mxu0 0
  %471 = vmatprep.subr.bf16.mxu0 0
  %472 = vmatpush2.bf16.msra.mxu0 0
  %473 = vmatprep.subr.bf16.mxu0 0
  %474 = vmatpush2.bf16.msra.mxu0 0
  %475 = vmatprep.subr.bf16.mxu0 0
  %476 = vmatpush2.bf16.msra.mxu0 0
  %477 = vmatprep.subr.bf16.mxu0 0
  %478 = vmatpush2.bf16.msra.mxu0 0
  %479 = vmatprep.subr.bf16.mxu0 0
  %480 = vmatpush2.bf16.msra.mxu0 0
  %481 = vmatprep.subr.bf16.mxu0 0
  %482 = vmatpush2.bf16.msra.mxu0 0
  %483 = vmatprep.subr.bf16.mxu0 0
  %484 = vmatpush2.bf16.msra.mxu0 0
  %485 = vmatprep.mubr.bf16.mxu0 0
  %486 = vmatmul.mubr.bf16.gmra.mxu0 %v92
  %v487 = vpop.f32.mrf.mxu0
  %v488 = vadd.f32 %v451, %v487
  %v489 = vpop.f32.mrf.mxu0
  %v490 = vpop.f32.mrf.mxu0
  %v491 = vadd.f32 %v451, %v490
  %v492 = vpop.f32.mrf.mxu0
  %493 = vmatprep.mubr.bf16.mxu0 0
  %494 = vmatmul.mubr.bf16.gmra.mxu0 %v93
  %v495 = vpop.f32.mrf.mxu0
  %v496 = vadd.f32 %v451, %v495
  %v497 = vpop.f32.mrf.mxu0
  %v498 = vpop.f32.mrf.mxu0
  %v499 = vadd.f32 %v451, %v498
  %v500 = vpop.f32.mrf.mxu0
  %501 = vmatprep.mubr.bf16.mxu0 0
  %502 = vmatmul.mubr.bf16.gmra.mxu0 %v94
  %v503 = vpop.f32.mrf.mxu0
  %v504 = vadd.f32 %v451, %v503
  %v505 = vpop.f32.mrf.mxu0
  %v506 = vpop.f32.mrf.mxu0
  %v507 = vadd.f32 %v451, %v506
  %v508 = vpop.f32.mrf.mxu0
  %509 = vmatprep.mubr.bf16.mxu0 0
  %510 = vmatmul.mubr.bf16.gmra.mxu0 %v95
  %v511 = vpop.f32.mrf.mxu0
  %v512 = vadd.f32 %v451, %v511
  %v513 = vpop.f32.mrf.mxu0
  %v514 = vpop.f32.mrf.mxu0
  %v515 = vadd.f32 %v451, %v514
  %v516 = vpop.f32.mrf.mxu0
  %517 = vmatprep.mubr.bf16.mxu0 0
  %518 = vmatmul.mubr.bf16.gmra.mxu0 %v96
  %v519 = vpop.f32.mrf.mxu0
  %v520 = vadd.f32 %v451, %v519
  %v521 = vpop.f32.mrf.mxu0
  %v522 = vpop.f32.mrf.mxu0
  %v523 = vadd.f32 %v451, %v522
  %v524 = vpop.f32.mrf.mxu0
  %525 = vmatprep.mubr.bf16.mxu0 0
  %526 = vmatmul.mubr.bf16.gmra.mxu0 %v97
  %v527 = vpop.f32.mrf.mxu0
  %v528 = vadd.f32 %v451, %v527
  %v529 = vpop.f32.mrf.mxu0
  %v530 = vpop.f32.mrf.mxu0
  %v531 = vadd.f32 %v451, %v530
  %v532 = vpop.f32.mrf.mxu0
  %533 = vmatprep.mubr.bf16.mxu0 0
  %534 = vmatmul.mubr.bf16.gmra.mxu0 %v98
  %v535 = vpop.f32.mrf.mxu0
  %v536 = vadd.f32 %v451, %v535
  %v537 = vpop.f32.mrf.mxu0
  %v538 = vpop.f32.mrf.mxu0
  %v539 = vadd.f32 %v451, %v538
  %v540 = vpop.f32.mrf.mxu0
  %541 = vmatprep.mubr.bf16.mxu0 0
  %542 = vmatmul.mubr.bf16.gmra.mxu0 %v99
  %v543 = vpop.f32.mrf.mxu0
  %v544 = vadd.f32 %v451, %v543
  %v545 = vpop.f32.mrf.mxu0
  %v546 = vpop.f32.mrf.mxu0
  %v547 = vadd.f32 %v451, %v546
  %v548 = vpop.f32.mrf.mxu0
  %549 = vdwg.mxu0
  %550 = vst [vmem:[%s5] sm:$0xff] %v488
  %551 = vst [vmem:[%s5 + $0x8] sm:$0xff] %v491
  %552 = vst [vmem:[%s5 + $0x10] sm:$0xff] %v496
  %553 = vst [vmem:[%s5 + $0x18] sm:$0xff] %v499
  %554 = vst [vmem:[%s5 + $0x20] sm:$0xff] %v504
  %555 = vst [vmem:[%s5 + $0x28] sm:$0xff] %v507
  %556 = vst [vmem:[%s5 + $0x30] sm:$0xff] %v512
  %557 = vst [vmem:[%s5 + $0x38] sm:$0xff] %v515
  %558 = vst [vmem:[%s5 + $0x40] sm:$0xff] %v520
  %559 = vst [vmem:[%s5 + $0x48] sm:$0xff] %v523
  %560 = vst [vmem:[%s5 + $0x50] sm:$0xff] %v528
  %561 = vst [vmem:[%s5 + $0x58] sm:$0xff] %v531
  %562 = vst [vmem:[%s5 + $0x60] sm:$0xff] %v536
  %563 = vst [vmem:[%s5 + $0x68] sm:$0xff] %v539
  %564 = vst [vmem:[%s5 + $0x70] sm:$0xff] %v544
  %565 = vst [vmem:[%s5 + $0x78] sm:$0xff] %v547
  // Predicated region
  $region22: #{gcn_encoder_forward.1} parent=0 // pred_check
    _
  $region23: #{gcn_encoder_forward.1} parent=0 // pred_check_branch
    %567 = sbr.rel (0) target = $region25
  $region24: #{gcn_encoder_forward.1} parent=0 // pred_region
    _
  $region25: #{gcn_encoder_forward.1} parent=0 // pred_fallthru
    _
  // Predicated region
  $region26: #{gcn_encoder_forward.1} parent=0 // pred_check
    _
  $region27: #{gcn_encoder_forward.1} parent=0 // pred_check_branch
    %569 = sbr.rel (0) target = $region29
  $region28: #{gcn_encoder_forward.1} parent=0 // pred_region
    _
  $region29: #{gcn_encoder_forward.1} parent=0 // pred_fallthru
    _

</llo_original>
